<compile_context>
chip_gen: v7x
topology: tpu7x:2x2x1
jax: 0.10.0
libtpu: 0.0.40
codegen_flags: <defaults>
</compile_context>

<pallas_src>
import jax
import jax.numpy as jnp
from jax.experimental import pallas as pl
from jax.experimental.pallas import tpu as pltpu


def _subspace_kernel(z_ref, u_ref, mu_ref, o_ref):
    # (tm, n_basis) @ (n_basis, tn) on the MXU, f32 accumulation, + bias.
    acc = jnp.dot(z_ref[...], u_ref[...], preferred_element_type=jnp.float32)
    o_ref[...] = (acc + mu_ref[...].astype(jnp.float32)).astype(o_ref.dtype)


def _round_up(x, m):
    return ((x + m - 1) // m) * m


def subspace_layer(z, U, L, mu, *, tm=None, tn=None):
    """out = (L * z) @ U + mu   — matches SubspaceLayer.forward."""
    B, n_basis = z.shape
    n_basis_u, dim = U.shape
    assert n_basis == n_basis_u
    out_dtype = z.dtype
    stream_dtype = U.dtype

    # Fold L into z (NOT into U): tiny elementwise op in f32, then a single
    # cast to the streaming dtype of U (hoisted out of the kernel).
    zs = (z.astype(jnp.float32) * L.astype(jnp.float32)[None, :]).astype(stream_dtype)

    sub = 16 if stream_dtype == jnp.bfloat16 else 8
    itemsize = jnp.dtype(stream_dtype).itemsize
    out_itemsize = jnp.dtype(out_dtype).itemsize

    # --- batch tiling: collapse the whole batch when it fits VMEM ----------
    if tm is None:
        B_al = _round_up(B, sub)
        tm = B_al if B_al * n_basis * itemsize <= (4 << 20) else 256
    tm = _round_up(tm, sub)
    B_p = _round_up(B, tm)

    # --- dim tiling: lane-dense, large, >=2 tiles when possible ------------
    if tn is None:
        tn = min(_round_up(dim, 128), 1024)
        if dim > 128 and _round_up(dim, 128) <= tn:
            # split into (at least) two dim tiles so both v7x TCs get work
            tn = max(128, _round_up(pl.cdiv(dim, 2), 128))
    tn = _round_up(tn, 128)

    # Keep the double-buffered working set well under every generation's
    # default scoped VMEM (16 MiB on v5e): 2 * (z + U tile + mu tile + out).
    def _vmem(tn_):
        return 2 * (tm * n_basis * itemsize
                    + n_basis * tn_ * itemsize
                    + tn_ * 4
                    + tm * tn_ * out_itemsize)

    while tn > 128 and _vmem(tn) > (12 << 20):
        tn = max(128, _round_up(tn // 2, 128))

    dim_p = _round_up(dim, tn)

    # Pad to tile multiples so edge tiles never store garbage (cheap: only a
    # thin slab of U is touched, and for the usual power-of-two dims it's 0).
    z_p = jnp.pad(zs, ((0, B_p - B), (0, 0))) if B_p != B else zs
    U_p = jnp.pad(U, ((0, 0), (0, dim_p - dim))) if dim_p != dim else U
    mu_p = mu.reshape(1, dim)
    if dim_p != dim:
        mu_p = jnp.pad(mu_p, ((0, 0), (0, dim_p - dim)))

    n_i = B_p // tm     # batch tiles (usually 1)
    n_j = dim_p // tn   # dim tiles

    cost = pl.CostEstimate(
        flops=2 * B_p * n_basis * dim_p,
        transcendentals=0,
        bytes_accessed=(
            B_p * n_basis * itemsize                 # z: fetched once
            + n_basis * dim_p * itemsize * n_i       # U: once per batch tile
            + dim_p * mu.dtype.itemsize * n_i
            + B_p * dim_p * out_itemsize
        ),
    )

    if n_i == 1:
        # 1-D grid over dim tiles: z and mu fetched once; only U/out stream.
        out_p = pl.pallas_call(
            _subspace_kernel,
            out_shape=jax.ShapeDtypeStruct((B_p, dim_p), out_dtype),
            grid=(n_j,),
            in_specs=[
                pl.BlockSpec((tm, n_basis), lambda j: (0, 0)),   # z: whole batch
                pl.BlockSpec((n_basis, tn), lambda j: (0, j)),   # U: dim tile
                pl.BlockSpec((1, tn), lambda j: (0, j)),         # mu: dim tile
            ],
            out_specs=pl.BlockSpec((tm, tn), lambda j: (0, j)),
            compiler_params=pltpu.CompilerParams(
                dimension_semantics=("parallel",),
            ),
            cost_estimate=cost,
        )(z_p, U_p, mu_p)
    else:
        # 2-D grid, dim OUTER / batch INNER: U's block index is constant over
        # the inner axis, so U is DMA'd exactly once (no re-stream per batch
        # tile).  Dim axis stays "parallel" for megacore.
        out_p = pl.pallas_call(
            _subspace_kernel,
            out_shape=jax.ShapeDtypeStruct((B_p, dim_p), out_dtype),
            grid=(n_j, n_i),
            in_specs=[
                pl.BlockSpec((tm, n_basis), lambda j, i: (i, 0)),
                pl.BlockSpec((n_basis, tn), lambda j, i: (0, j)),
                pl.BlockSpec((1, tn), lambda j, i: (0, j)),
            ],
            out_specs=pl.BlockSpec((tm, tn), lambda j, i: (i, j)),
            compiler_params=pltpu.CompilerParams(
                dimension_semantics=("parallel", "arbitrary"),
            ),
            cost_estimate=cost,
        )(z_p, U_p, mu_p)

    return out_p[:B, :dim]


def init_params(key, dim, n_basis, dtype=jnp.float32):
    """Deterministic parameter init matching the module's __init__ shapes."""
    # U: orthogonal (n_basis, dim) — orthonormal rows, like nn.init.orthogonal_.
    a = jax.random.normal(key, (dim, n_basis), dtype=jnp.float32)
    q, _ = jnp.linalg.qr(a)                  # (dim, n_basis) orthonormal columns
    U = q.T.astype(dtype)                    # (n_basis, dim)
    # L: [3*n_basis, 3*(n_basis-1), ..., 3]
    L = jnp.array([3.0 * i for i in range(n_basis, 0, -1)], dtype=jnp.float32)
    mu = jnp.zeros((dim,), dtype=jnp.float32)
    return U, L, mu


if __name__ == "__main__":
    key = jax.random.PRNGKey(0)
    k_z, k_u, k_mu, k_z2 = jax.random.split(key, 4)

    # --- test 1: small, non-tile-multiple shapes, auto tiling (1-D grid) ---
    B, n_basis, dim = 12, 8, 320
    z = jax.random.normal(k_z, (B, n_basis), dtype=jnp.float32)
    U, L, _ = init_params(k_u, dim, n_basis)
    mu = 0.1 * jax.random.normal(k_mu, (dim,), dtype=jnp.float32)  # non-zero bias

    ref = (L * z) @ U + mu                      # exact PyTorch forward semantics
    out = jax.block_until_ready(subspace_layer(z, U, L, mu))
    assert out.shape == (B, dim)
    assert jnp.allclose(out, ref, atol=2e-2, rtol=2e-2), \
        float(jnp.abs(out - ref).max())

    # --- test 2: larger batch + explicit small tiles -> 2-D grid path ------
    B2 = 40
    z2 = jax.random.normal(k_z2, (B2, n_basis), dtype=jnp.float32)
    ref2 = (L * z2) @ U + mu
    out2 = jax.block_until_ready(subspace_layer(z2, U, L, mu, tm=8, tn=128))
    assert out2.shape == (B2, dim)
    assert jnp.allclose(out2, ref2, atol=2e-2, rtol=2e-2), \
        float(jnp.abs(out2 - ref2).max())

    # --- test 3: bf16 weight streaming (halved HBM traffic), f32 accum -----
    # Documented precision drop: z is streamed in bf16 alongside bf16 U.
    out_bf = jax.block_until_ready(
        subspace_layer(z, U.astype(jnp.bfloat16), L, mu)
    )
    assert jnp.allclose(out_bf, ref, atol=0.5, rtol=0.05)

    print("KERNEL_OK")
</pallas_src>

<mosaic_0001>
module attributes {stable_mosaic.version = 11 : i64} {
  func.func @_subspace_kernel(%arg0: i32, %arg1: memref<16x8xf32, #tpu.memory_space<vmem>>, %arg2: memref<8x256xf32, #tpu.memory_space<vmem>>, %arg3: memref<1x256xf32, #tpu.memory_space<vmem>>, %arg4: memref<16x256xf32, #tpu.memory_space<vmem>>) attributes {dimension_semantics = [#tpu.dimension_semantics<parallel>], iteration_bounds = array<i64: 2>, scalar_prefetch = 0 : i64, scratch_operands = 0 : i64, tpu.core_type = #tpu.core_type<tc>, window_params = [{pipeline_mode = #tpu.pipeline_mode<synchronous>, transform_indices = @transform_0, window_bounds = array<i64: 16, 8>}, {transform_indices = @transform_1, window_bounds = array<i64: 8, 256>}, {transform_indices = @transform_2, window_bounds = array<i64: 1, 256>}, {transform_indices = @transform_3, window_bounds = array<i64: 16, 256>}]} {
    %c0 = arith.constant 0 : index
    %c0_0 = arith.constant 0 : index
    %0 = vector.load %arg1[%c0, %c0_0] : memref<16x8xf32, #tpu.memory_space<vmem>>, vector<16x8xf32>
    %c0_1 = arith.constant 0 : index
    %c0_2 = arith.constant 0 : index
    %1 = vector.load %arg2[%c0_1, %c0_2] : memref<8x256xf32, #tpu.memory_space<vmem>>, vector<8x256xf32>
    %cst = arith.constant dense<0.000000e+00> : vector<16x256xf32>
    %2 = tpu.matmul %0, %1, %cst {dimension_numbers = #tpu.dot_dimension_numbers<[1], [0], [0], [1], [0, 0, 1, 1], [], []>} : vector<16x8xf32>, vector<8x256xf32>, vector<16x256xf32> -> vector<16x256xf32>
    %c0_3 = arith.constant 0 : index
    %c0_4 = arith.constant 0 : index
    %3 = vector.load %arg3[%c0_3, %c0_4] : memref<1x256xf32, #tpu.memory_space<vmem>>, vector<1x256xf32>
    %4 = vector.broadcast %3 : vector<1x256xf32> to vector<16x256xf32>
    %5 = arith.addf %2, %4 : vector<16x256xf32>
    %c0_5 = arith.constant 0 : index
    %c0_6 = arith.constant 0 : index
    %6 = vector.load %arg4[%c0_5, %c0_6] : memref<16x256xf32, #tpu.memory_space<vmem>>, vector<16x256xf32>
    tpu.vector_store %arg4[%c0_5, %c0_6], %5 {strides = array<i32>} : memref<16x256xf32, #tpu.memory_space<vmem>>, vector<16x256xf32>,
    return
  }
  func.func @transform_0(%arg0: i32) -> (i32, i32) {
    %c0_i32 = arith.constant 0 : i32
    %c0_i32_0 = arith.constant 0 : i32
    %c0_i32_1 = arith.constant 0 : i32
    return %c0_i32, %c0_i32_0 : i32, i32
  }
  func.func @transform_1(%arg0: i32) -> (i32, i32) {
    %c0_i32 = arith.constant 0 : i32
    %c0_i32_0 = arith.constant 0 : i32
    return %c0_i32, %arg0 : i32, i32
  }
  func.func @transform_2(%arg0: i32) -> (i32, i32) {
    %c0_i32 = arith.constant 0 : i32
    %c0_i32_0 = arith.constant 0 : i32
    return %c0_i32, %arg0 : i32, i32
  }
  func.func @transform_3(%arg0: i32) -> (i32, i32) {
    %c0_i32 = arith.constant 0 : i32
    %c0_i32_0 = arith.constant 0 : i32
    return %c0_i32, %arg0 : i32, i32
  }
}

</mosaic_0001>

<llo_original>
// kernel: tpu_custom_call.1
$region0: #{tpu_custom_call.1}
  #allocation0 [shape = 'u32[]', space=smem, size = 0x4, offset = 0x4, fixed_abs, tag = 'smem constant byte address 0x4 - core index']
  #allocation1 [shape = 'u32[144,128]{1,0:T(1,128)}', space=vmem, size = 0x12000, scoped, tag = 'internal scratch']
  %s0 = inlined_call_operand.vmem [shape: f32[16,8], index: 0, kind: input, shape index: {}]
  %s1 = inlined_call_operand.hbm [shape: f32[8,512], index: 1, kind: input, shape index: {}]
  %s2 = inlined_call_operand.vmem [shape: f32[1,512], index: 2, kind: input, shape index: {}]
  %s3 = inlined_call_operand.hbm [shape: f32[16,512], index: 3, kind: output, shape index: {}]
  %s4 = sld [smem:[#allocation0]]
  $region49: #{tpu_custom_call.1} parent=0
    _
  %s6 = ssub.s32 1, %s4
  %s7 = scalar_select 0, %s6, %s4
  $region1: #{tpu_custom_call.1} parent=0
    #allocation2 [shape = 'u8[16384]{0}', space=vmem, size = 0x4000, scoped, tag = 'input window, operand 1']
    #allocation3 [shape = 's32[2]{0}', space=sflag, size = 0x8, scoped, tag = 'scoped memory for tpu_custom_call.1']
    #allocation4 [shape = 's32[2]{0}', space=sflag, size = 0x8, scoped, tag = 'scoped memory for tpu_custom_call.1']
    #allocation5 [shape = 'u8[32768]{0}', space=vmem, size = 0x8000, scoped, tag = 'output window, operand 0']
    %8 = vsyncpa [#allocation3], 0
    %s9 = scalar_lea.sflag [#allocation3], 1
    %10 = vsyncpa %s9, 0
    %11 = vsyncpa [#allocation4], 0
    %s12 = scalar_lea.sflag [#allocation4], 1
    %13 = vsyncpa %s12, 0
    loop: start=0, step=1, limit=4
    $region2: #{tpu_custom_call.1} parent=1 // loop_pre_header
      _
    $region3: #{tpu_custom_call.1} parent=1 // loop_header
      %s15 = sphi 0, %s19
      %p16 = scmp.ge.s32.totalorder %s15, 4
      %s23 = sphi 0, %s23
      %s25 = sphi 0, %s23
      %s26 = sphi 0, %s25
      %s40 = sphi 0, %s26
      %s46 = sphi 0, %s48
      %s49 = sphi 0, %s46
      %s50 = sphi 0, %s49
      %s66 = sphi 0, %s50
      %s72 = sphi 0, %s74
      %s75 = sphi 0, %s72
      %s76 = sphi 0, %s75
      %s92 = sphi 0, %s76
      %s98 = sphi 0, %s100
      %s101 = sphi 0, %s98
      %s102 = sphi 0, %s101
      %s118 = sphi 0, %s102
    $region4: #{tpu_custom_call.1} parent=1 // loop_header_branch
      %18 = sbr.rel (%p16) target = $region8
    $region5: #{tpu_custom_call.1} parent=1 // loop_body
      %s20 = ssub.s32 %s15, 1
      %s21 = ssub.s32 %s15, 2
      %s22 = sadd.s32 %s15, 1
      %s24 = sadd.s32 %s23, 1
      %p27 = scmp.eq.s32.totalorder %s15, 1
      %p28 = scmp.ne.s32.totalorder %s23, %s25
      %p29 = scmp.eq.s32.totalorder %s15, 0
      %p30 = por %p28, %p29
      %p31 = scmp.ne.s32.totalorder %s23, %s25
      %p32 = scmp.eq.s32.totalorder %s20, 1
      %p33 = por %p31, %p32
      %p34 = scmp.ne.s32.totalorder %s25, %s26
      %p35 = scmp.eq.s32.totalorder %s20, 0
      %p36 = por %p34, %p35
      %p37 = scmp.ne.s32.totalorder %s25, %s26
      %p38 = scmp.eq.s32.totalorder %s21, 1
      %p39 = por %p37, %p38
      %p41 = scmp.ne.s32.totalorder %s26, %s40
      %p42 = scmp.eq.s32.totalorder %s21, 0
      %p43 = por %p41, %p42
      %s44 = ssub.s32 %s15, %s22
      %p45 = scmp.eq.s32.totalorder %s44, 0
      %s47 = sadd.s32 %s46, 1
      %s48 = scalar_select %p45, %s46, %s47
      %p51 = pneg %p45
      %p52 = scmp.eq.s32.totalorder %s15, 1
      %p53 = por %p51, %p52
      %p54 = scmp.ne.s32.totalorder %s46, %s49
      %p55 = scmp.eq.s32.totalorder %s15, 0
      %p56 = por %p54, %p55
      %p57 = scmp.ne.s32.totalorder %s46, %s49
      %p58 = scmp.eq.s32.totalorder %s20, 1
      %p59 = por %p57, %p58
      %p60 = scmp.ne.s32.totalorder %s49, %s50
      %p61 = scmp.eq.s32.totalorder %s20, 0
      %p62 = por %p60, %p61
      %p63 = scmp.ne.s32.totalorder %s49, %s50
      %p64 = scmp.eq.s32.totalorder %s21, 1
      %p65 = por %p63, %p64
      %p67 = scmp.ne.s32.totalorder %s50, %s66
      %p68 = scmp.eq.s32.totalorder %s21, 0
      %p69 = por %p67, %p68
      %s70 = ssub.s32 %s15, %s22
      %p71 = scmp.eq.s32.totalorder %s70, 0
      %s73 = sadd.s32 %s72, 1
      %s74 = scalar_select %p71, %s72, %s73
      %p77 = pneg %p71
      %p78 = scmp.eq.s32.totalorder %s15, 1
      %p79 = por %p77, %p78
      %p80 = scmp.ne.s32.totalorder %s72, %s75
      %p81 = scmp.eq.s32.totalorder %s15, 0
      %p82 = por %p80, %p81
      %p83 = scmp.ne.s32.totalorder %s72, %s75
      %p84 = scmp.eq.s32.totalorder %s20, 1
      %p85 = por %p83, %p84
      %p86 = scmp.ne.s32.totalorder %s75, %s76
      %p87 = scmp.eq.s32.totalorder %s20, 0
      %p88 = por %p86, %p87
      %p89 = scmp.ne.s32.totalorder %s75, %s76
      %p90 = scmp.eq.s32.totalorder %s21, 1
      %p91 = por %p89, %p90
      %p93 = scmp.ne.s32.totalorder %s76, %s92
      %p94 = scmp.eq.s32.totalorder %s21, 0
      %p95 = por %p93, %p94
      %s96 = ssub.s32 %s15, %s22
      %p97 = scmp.eq.s32.totalorder %s96, 0
      %s99 = sadd.s32 %s98, 1
      %s100 = scalar_select %p97, %s98, %s99
      %p103 = pneg %p97
      %p104 = scmp.eq.s32.totalorder %s15, 1
      %p105 = por %p103, %p104
      %p106 = scmp.ne.s32.totalorder %s98, %s101
      %p107 = scmp.eq.s32.totalorder %s15, 0
      %p108 = por %p106, %p107
      %p109 = scmp.ne.s32.totalorder %s98, %s101
      %p110 = scmp.eq.s32.totalorder %s20, 1
      %p111 = por %p109, %p110
      %p112 = scmp.ne.s32.totalorder %s101, %s102
      %p113 = scmp.eq.s32.totalorder %s20, 0
      %p114 = por %p112, %p113
      %p115 = scmp.ne.s32.totalorder %s101, %s102
      %p116 = scmp.eq.s32.totalorder %s21, 1
      %p117 = por %p115, %p116
      %p119 = scmp.ne.s32.totalorder %s102, %s118
      %p120 = scmp.eq.s32.totalorder %s21, 0
      %p121 = por %p119, %p120
      %p122 = scmp.le.s32.totalorder 1, %s15
      %p123 = scmp.lt.s32.totalorder %s15, 3
      %p124 = pnand %p122, %p123
      %p125 = pneg %p124
      // Predicated region
      $region9: #{tpu_custom_call.1} parent=5 // pred_check
        _
      $region10: #{tpu_custom_call.1} parent=5 // pred_check_branch
        %127 = sbr.rel (%p124) target = $region12
      $region11: #{tpu_custom_call.1} parent=5 // pred_region
        %s128 = ssub.s32 %s15, 1
        // Predicated region
        $region13: #{tpu_custom_call.1} parent=11 // pred_check
          %p129 = pneg %p36
        $region14: #{tpu_custom_call.1} parent=11 // pred_check_branch
          %131 = sbr.rel (%p129) target = $region16
        $region15: #{tpu_custom_call.1} parent=11 // pred_region
          _
        $region16: #{tpu_custom_call.1} parent=11 // pred_fallthru
          _
      $region12: #{tpu_custom_call.1} parent=5 // pred_fallthru
        _
      %p132 = scmp.lt.s32.totalorder %s15, 2
      // Predicated region
      $region17: #{tpu_custom_call.1} parent=5 // pred_check
        %p133 = pneg %p132
      $region18: #{tpu_custom_call.1} parent=5 // pred_check_branch
        %135 = sbr.rel (%p133) target = $region20
      $region19: #{tpu_custom_call.1} parent=5 // pred_region
        // Predicated region
        $region21: #{tpu_custom_call.1} parent=19 // pred_check
          %p136 = pneg %p56
        $region22: #{tpu_custom_call.1} parent=19 // pred_check_branch
          %138 = sbr.rel (%p136) target = $region24
        $region23: #{tpu_custom_call.1} parent=19 // pred_region
          %s139 = sand.u32 %s46, 1
          %s140 = scalar_lea.sflag [#allocation3], %s139
          %s141 = sand.u32 %s46, 1
          %s142 = smul.addr %s141, 16
          %s143 = scalar_lea.vmem [#allocation2], %s142
          %s144 = smul.u32 2, %s15
          %s146 = ssub.s32 256, 256
          %147 = vsyncadd %s140, %s146
          %s148 = smul.addr %s144, 128
          %s149 = scalar_lea.hbm %s1, %s148
          %s151 = sshll.u32 %s143, 4
          %s152 = int_to_ptr.vmem [resolvable:$true] %s151
          %154 = dma.hbm_to_vmem [thread:$0]  %s149, 256, %s152, %s140
        $region24: #{tpu_custom_call.1} parent=19 // pred_fallthru
          _
        // Predicated region
        $region25: #{tpu_custom_call.1} parent=19 // pred_check
          %p155 = pneg %p82
        $region26: #{tpu_custom_call.1} parent=19 // pred_check_branch
          %157 = sbr.rel (%p155) target = $region28
        $region27: #{tpu_custom_call.1} parent=19 // pred_region
          %s158 = smul.u32 2, %s15
          %p159 = scmp.lt.s32.totalorder %s158, 3
          %s160 = scalar_select %p159, %s158, 3
          %s161 = scalar_lea.vmem %s2, %s160
          %s162 = smul.u32 2, %s15
        $region28: #{tpu_custom_call.1} parent=19 // pred_fallthru
          _
      $region20: #{tpu_custom_call.1} parent=5 // pred_fallthru
        _
      %p163 = scmp.le.s32.totalorder 1, %s15
      %p164 = scmp.lt.s32.totalorder %s15, 3
      %p165 = pnand %p163, %p164
      %p166 = pneg %p165
      // Predicated region
      $region29: #{tpu_custom_call.1} parent=5 // pred_check
        _
      $region30: #{tpu_custom_call.1} parent=5 // pred_check_branch
        %168 = sbr.rel (%p165) target = $region32
      $region31: #{tpu_custom_call.1} parent=5 // pred_region
        %s169 = ssub.s32 %s15, 1
        %s170 = sand.u32 %s49, 1
        %s171 = scalar_lea.sflag [#allocation3], %s170
        %s172 = sand.u32 %s49, 1
        %s173 = smul.addr %s172, 16
        %s174 = scalar_lea.vmem [#allocation2], %s173
        // Predicated region
        $region33: #{tpu_custom_call.1} parent=31 // pred_check
          %p175 = pneg %p62
        $region34: #{tpu_custom_call.1} parent=31 // pred_check_branch
          %177 = sbr.rel (%p175) target = $region36
        $region35: #{tpu_custom_call.1} parent=31 // pred_region
          %178 = dma.done %s171, 256
        $region36: #{tpu_custom_call.1} parent=31 // pred_fallthru
          _
        %p179 = pneg %p36
        %p180 = pneg %p33
        %s181 = sand.u32 %s49, 1
        %s182 = scalar_lea.sflag [#allocation3], %s181
        %s183 = sand.u32 %s49, 1
        %s184 = smul.addr %s183, 16
        %s185 = scalar_lea.vmem [#allocation2], %s184
        %p186 = pneg %p62
        %p187 = pneg %p59
        %s188 = smul.u32 2, %s20
        %p189 = scmp.lt.s32.totalorder %s188, 3
        %s190 = scalar_select %p189, %s188, 3
        %s191 = scalar_lea.vmem %s2, %s190
        %p192 = pneg %p88
        %p193 = pneg %p85
        %p194 = pneg %p114
        %p195 = pneg %p111
        %s196 = sand.u32 %s101, 1
        %s197 = scalar_lea.sflag [#allocation4], %s196
        %s198 = sand.u32 %s101, 1
        %s199 = smul.addr %s198, 32
        %s200 = scalar_lea.vmem [#allocation5], %s199
        %s201 = smul.u32 2, %s20
        %s202 = smul.u32 2, %s20
        %p203 = scmp.lt.s32.totalorder %s202, 3
        %s204 = scalar_select %p203, %s202, 3
        %s205 = scalar_lea.vmem %s2, %s204
        %s206 = smul.u32 2, %s20
        %s207 = smul.u32 2, %s20
        %v208 = vld [vmem:[%s0] sm:$0xff]
        %v209 = vld [vmem:[%s0 + $0x8] sm:$0xff]
        %v210 = vld [vmem:[%s174] sm:$0xff]
        %v211 = vld [vmem:[%s174 + $0x8] sm:$0xff]
        %v212 = vld [vmem:[%s205] sm:$0x3]
        %v214 = vlaneseq
        %v215 = vshrl.u32 %v214, 7
        %v216 = vsub.s32 0, %v215
        %v217 = vrot.slane %v212, %v216
        %v218 = vlaneseq
        %v219 = vshrl.u32 %v218, 7
        %v220 = vsub.s32 1, %v219
        %v221 = vrot.slane %v212, %v220
        %vm224 = vcmask 64512
        %v226 = vsel %vm224, %v208, 0
        %v229 = vsel %vm224, %v209, 0
        %231 = vmatprep.subr.mxu0 %v211
        %232 = vmatpush1.msra.mxu0 %v210
        %233 = vmatprep.subr.mxu0 0.0
        %234 = vmatpush1.msra.mxu0 0.0
        %235 = vmatprep.subr.mxu0 0.0
        %236 = vmatpush1.msra.mxu0 0.0
        %237 = vmatprep.subr.mxu0 0.0
        %238 = vmatpush1.msra.mxu0 0.0
        %239 = vmatprep.subr.mxu0 0.0
        %240 = vmatpush1.msra.mxu0 0.0
        %241 = vmatprep.subr.mxu0 0.0
        %242 = vmatpush1.msra.mxu0 0.0
        %243 = vmatprep.subr.mxu0 0.0
        %244 = vmatpush1.msra.mxu0 0.0
        %245 = vmatprep.subr.mxu0 0.0
        %246 = vmatpush1.msra.mxu0 0.0
        %247 = vmatprep.subr.mxu0 0.0
        %248 = vmatpush1.msra.mxu0 0.0
        %249 = vmatprep.subr.mxu0 0.0
        %250 = vmatpush1.msra.mxu0 0.0
        %251 = vmatprep.subr.mxu0 0.0
        %252 = vmatpush1.msra.mxu0 0.0
        %253 = vmatprep.subr.mxu0 0.0
        %254 = vmatpush1.msra.mxu0 0.0
        %255 = vmatprep.subr.mxu0 0.0
        %256 = vmatpush1.msra.mxu0 0.0
        %257 = vmatprep.subr.mxu0 0.0
        %258 = vmatpush1.msra.mxu0 0.0
        %259 = vmatprep.subr.mxu0 0.0
        %260 = vmatpush1.msra.mxu0 0.0
        %261 = vmatprep.subr.mxu0 0.0
        %262 = vmatpush1.msra.mxu0 0.0
        %263 = vmatprep.subr.mxu0 0.0
        %264 = vmatpush1.msra.mxu0 0.0
        %265 = vmatprep.subr.mxu0 0.0
        %266 = vmatpush1.msra.mxu0 0.0
        %267 = vmatprep.subr.mxu0 0.0
        %268 = vmatpush1.msra.mxu0 0.0
        %269 = vmatprep.subr.mxu0 0.0
        %270 = vmatpush1.msra.mxu0 0.0
        %271 = vmatprep.subr.mxu0 0.0
        %272 = vmatpush1.msra.mxu0 0.0
        %273 = vmatprep.subr.mxu0 0.0
        %274 = vmatpush1.msra.mxu0 0.0
        %275 = vmatprep.subr.mxu0 0.0
        %276 = vmatpush1.msra.mxu0 0.0
        %277 = vmatprep.subr.mxu0 0.0
        %278 = vmatpush1.msra.mxu0 0.0
        %279 = vmatprep.subr.mxu0 0.0
        %280 = vmatpush1.msra.mxu0 0.0
        %281 = vmatprep.subr.mxu0 0.0
        %282 = vmatpush1.msra.mxu0 0.0
        %283 = vmatprep.subr.mxu0 0.0
        %284 = vmatpush1.msra.mxu0 0.0
        %285 = vmatprep.subr.mxu0 0.0
        %286 = vmatpush1.msra.mxu0 0.0
        %287 = vmatprep.subr.mxu0 0.0
        %288 = vmatpush1.msra.mxu0 0.0
        %289 = vmatprep.subr.mxu0 0.0
        %290 = vmatpush1.msra.mxu0 0.0
        %291 = vmatprep.subr.mxu0 0.0
        %292 = vmatpush1.msra.mxu0 0.0
        %293 = vmatprep.subr.mxu0 0.0
        %294 = vmatpush1.msra.mxu0 0.0
        %295 = vmatprep.mubr.f32.mxu0 0.0
        %296 = vmatmul.mubr.f32.gmra.mrb[0].mxu0 %v226
        %v297 = vpop.f32.mrb[0].mxu0
        %v298 = vadd.f32 %v217, %v297
        %v299 = vpop.f32.mrb[0].mxu0
        %v300 = vadd.f32 %v221, %v299
        %301 = vmatprep.mubr.f32.mxu0 0.0
        %302 = vmatmul.mubr.f32.gmra.mrb[0].mxu0 %v229
        %v303 = vpop.f32.mrb[0].mxu0
        %v304 = vadd.f32 %v217, %v303
        %v305 = vpop.f32.mrb[0].mxu0
        %v306 = vadd.f32 %v221, %v305
        %307 = vdwg.mxu0
        %308 = vst [vmem:[%s200] sm:$0xff] %v298
        %309 = vst [vmem:[%s200 + $0x8] sm:$0xff] %v300
        %310 = vst [vmem:[%s200 + $0x10] sm:$0xff] %v304
        %311 = vst [vmem:[%s200 + $0x18] sm:$0xff] %v306
        %s312 = sand.u32 %s101, 1
        %s313 = scalar_lea.sflag [#allocation4], %s312
        %s314 = sand.u32 %s101, 1
        %s315 = smul.addr %s314, 32
        %s316 = scalar_lea.vmem [#allocation5], %s315
        // Predicated region
        $region37: #{tpu_custom_call.1} parent=31 // pred_check
          %p317 = pneg %p111
        $region38: #{tpu_custom_call.1} parent=31 // pred_check_branch
          %319 = sbr.rel (%p317) target = $region40
        $region39: #{tpu_custom_call.1} parent=31 // pred_region
          %s320 = smul.u32 2, %s20
          %s322 = ssub.s32 512, 512
          %323 = vsyncadd %s313, %s322
          %s324 = smul.addr %s320, 128
          %s325 = scalar_lea.hbm %s3, %s324
          %s326 = sshll.u32 %s316, 4
          %s327 = int_to_ptr.vmem [resolvable:$true] %s326
          %332 = dma.vmem_to_hbm [thread:$0]  %s327, 512, %s325, %s313, 256, 512, 16
        $region40: #{tpu_custom_call.1} parent=31 // pred_fallthru
          _
      $region32: #{tpu_custom_call.1} parent=5 // pred_fallthru
        _
      %p333 = scmp.le.s32.totalorder 2, %s15
      // Predicated region
      $region41: #{tpu_custom_call.1} parent=5 // pred_check
        %p334 = pneg %p333
      $region42: #{tpu_custom_call.1} parent=5 // pred_check_branch
        %336 = sbr.rel (%p334) target = $region44
      $region43: #{tpu_custom_call.1} parent=5 // pred_region
        %s337 = ssub.s32 %s15, 2
        // Predicated region
        $region45: #{tpu_custom_call.1} parent=43 // pred_check
          %p338 = pneg %p117
        $region46: #{tpu_custom_call.1} parent=43 // pred_check_branch
          %340 = sbr.rel (%p338) target = $region48
        $region47: #{tpu_custom_call.1} parent=43 // pred_region
          %s341 = sand.u32 %s102, 1
          %s342 = scalar_lea.sflag [#allocation4], %s341
          %s343 = sand.u32 %s102, 1
          %s344 = smul.addr %s343, 32
          %s345 = scalar_lea.vmem [#allocation5], %s344
          %346 = dma.done %s342, 512
        $region48: #{tpu_custom_call.1} parent=43 // pred_fallthru
          _
      $region44: #{tpu_custom_call.1} parent=5 // pred_fallthru
        _
    $region6: #{tpu_custom_call.1} parent=1 // loop_footer
      %s19 = sadd.s32 1, %s15
    $region7: #{tpu_custom_call.1} parent=1 // loop_footer_branch
      %14 = sbr.rel target = $region3
    $region8: #{tpu_custom_call.1} parent=1 // loop_exit
      _
    %347 = vsyncpa [#allocation3], 1
    %s348 = scalar_lea.sflag [#allocation3], 1
    %349 = vsyncpa %s348, 1
    %350 = vsyncpa [#allocation4], 1
    %s351 = scalar_lea.sflag [#allocation4], 1
    %352 = vsyncpa %s351, 1

</llo_original>
